<compile_context>
chip_gen: v7x
topology: tpu7x:2x2x1
jax: 0.10.0
libtpu: 0.0.40
codegen_flags: <defaults>
</compile_context>

<pallas_src>
import functools

import numpy as np
import jax
import jax.numpy as jnp
from jax.experimental import pallas as pl
from jax.experimental.pallas import tpu as pltpu

ALPHA = 5.0                       # scaling factor for normalized features
ALPHA2 = ALPHA * ALPHA
TWO_ALPHA2 = 2.0 * ALPHA2
INV_LN2 = float(1.0 / np.log(2.0))
NEG_INF = float(-np.inf)
POS_INF = float(np.inf)


def _pack3(loss, dp, dn, shape):
    """(8,128) f32 tile with [0,0]=loss, [0,1]=dp, [0,2]=dn, rest zero."""
    lane = jax.lax.broadcasted_iota(jnp.int32, shape, 1)
    sub = jax.lax.broadcasted_iota(jnp.int32, shape, 0)
    vals = jnp.where(lane == 0, loss,
                     jnp.where(lane == 1, dp,
                               jnp.where(lane == 2, dn, 0.0)))
    return jnp.where(sub == 0, vals, 0.0)


def _her_kernel(grd_ref, sat_ref, satd_ref, out_ref, u_ref, *,
                batch, beta, exp_neg_beta, w_low, w_high, fill_low, pad):
    r = pl.program_id(0)          # row-block index (parallel)
    c = pl.program_id(1)          # column-block index (arbitrary / reduction)
    t, d = grd_ref.shape

    grd = grd_ref[...]            # (T, D) ground rows for this row block
    sat = sat_ref[...]            # (T, D) satellite rows for this column block

    # ---- row-block-invariant terms: computed once per row block ------------
    @pl.when(c == 0)
    def _():
        satd = satd_ref[...]                                     # diag-aligned sat rows
        diff = grd - satd
        dp_raw = jnp.sum(diff * diff, axis=1, keepdims=True)    # (T,1) un-scaled dp
        dg_raw = jnp.sum(grd * grd, axis=1, keepdims=True)      # (T,1) |grd|^2
        u = ALPHA2 * (dp_raw - dg_raw) + beta                   # (T,1)
        if pad:
            rows = r * t + jax.lax.broadcasted_iota(jnp.int32, (t, 1), 0)
            u = jnp.where(rows < batch, u, NEG_INF)   # padded rows -> e=0 -> loss 0
        u_ref[...] = u
        # initialize the accumulator with the row-block-constant sums:
        dp_sum = ALPHA2 * jnp.sum(dp_raw, axis=0, keepdims=True)             # (1,1)
        dn_dg = (ALPHA2 * float(batch)) * jnp.sum(dg_raw, axis=0, keepdims=True)
        out_ref[...] = _pack3(0.0, dp_sum, dn_dg, out_ref.shape)

    # ---- per (row block, column block) work ---------------------------------
    cross = jax.lax.dot_general(grd, sat, (((1,), (1,)), ((), ())),
                                preferred_element_type=jnp.float32)          # (T,T)
    ones_row = jnp.ones((1, d), dtype=jnp.float32)
    ds_raw = jax.lax.dot_general(ones_row, sat * sat, (((1,), (1,)), ((), ())),
                                 preferred_element_type=jnp.float32)         # (1,T)
    v = ALPHA2 * ds_raw                                                      # (1,T)
    if pad:
        cols = c * t + jax.lax.broadcasted_iota(jnp.int32, (1, t), 1)
        v = jnp.where(cols < batch, v, POS_INF)      # padded cols -> e=0 -> loss 0

    u = u_ref[...]                                                           # (T,1)
    # dist_rec = dp_i - dn_ij + beta, with ALPHA^2 folded into u, v and cross.
    dist_rec = TWO_ALPHA2 * cross + u - v                                    # (T,T)
    e = jnp.exp(dist_rec)                    # shared exp (EUP); same overflow
                                             # behavior as the reference for
                                             # typical (normalized) features
    w = jnp.log(1.0 + e) * INV_LN2           # == relu(-log2(1/(1+e))); relu dropped
    w = jnp.where(w < w_low, fill_low, w)    # pruning over simple data
    w = jnp.where(w > w_high, w_high, w)     # pruning over extreme hard data
    losses = w * jnp.log(1.0 + e * exp_neg_beta)     # exp(dp-dn) = e*exp(-beta)

    loss_sum = jnp.sum(jnp.sum(losses, axis=1, keepdims=True), axis=0, keepdims=True)
    sum_ds = jnp.sum(ds_raw, axis=1, keepdims=True)                          # (1,1)
    sum_cross = jnp.sum(jnp.sum(cross, axis=1, keepdims=True), axis=0, keepdims=True)
    if pad:
        nvr = jnp.minimum(t, batch - r * t).astype(jnp.float32)  # valid rows in block
    else:
        nvr = float(t)
    # analytic dn partial sum: sum_ij A^2*(dg_i + ds_j - 2*cross_ij)
    dn_step = ALPHA2 * (nvr * sum_ds) - TWO_ALPHA2 * sum_cross
    out_ref[...] += _pack3(loss_sum, 0.0, dn_step, out_ref.shape)

    # ---- diagonal of w_mask is zeroed in the reference: subtract its loss ----
    @pl.when(r == c)
    def _():
        li = jax.lax.broadcasted_iota(jnp.int32, (t, t), 0)
        lj = jax.lax.broadcasted_iota(jnp.int32, (t, t), 1)
        dloss = jnp.where(li == lj, losses, 0.0)
        dsum = jnp.sum(jnp.sum(dloss, axis=1, keepdims=True), axis=0, keepdims=True)
        out_ref[...] -= _pack3(dsum, 0.0, 0.0, out_ref.shape)


def _choose_tile(b, d):
    """Square tile T (multiple of 8): >=2 row blocks when possible, cap 512,
    keep the VMEM working set well under every generation's limit (v7x 64MiB)."""
    t = max(8, min(512, 8 * ((b + 15) // 16)))
    # 3 double-buffered (T,D) input blocks + ~6 live (T,T) f32 temporaries
    while t > 8 and (3 * t * d * 4 * 2 + 6 * t * t * 4) > (20 << 20):
        t = max(8, (t // 2) // 8 * 8)
    return t


def her_triloss_or_unnorm(sat_global, grd_global, margin_cal, *, tile=None):
    """Returns (loss_mean, distance_positive_mean, distance_negative_mean)."""
    sat_global = sat_global.astype(jnp.float32)
    grd_global = grd_global.astype(jnp.float32)
    B, D = grd_global.shape
    assert sat_global.shape == (B, D)

    margin = ALPHA2 * float(margin_cal)
    beta = margin / 2.0
    # weight-mask pruning thresholds (computed with numpy, like the module)
    w_low = float(-np.log2(1.0 / (1.0 + np.exp(-1.0 * margin + beta) + 1e-8)))
    w_high = float(-np.log2(1.0 / (1.0 + np.exp(-0.0 * margin + beta) + 1e-8)))
    fill_low = 0.1 / B
    exp_neg_beta = float(np.exp(-beta))

    t = int(tile) if tile is not None else _choose_tile(B, D)
    assert t % 8 == 0
    b_pad = t * ((B + t - 1) // t)
    pad = b_pad != B
    if pad:
        extra = b_pad - B
        sat_p = jnp.pad(sat_global, ((0, extra), (0, 0)))
        grd_p = jnp.pad(grd_global, ((0, extra), (0, 0)))
    else:
        sat_p, grd_p = sat_global, grd_global
    g = b_pad // t

    kernel = functools.partial(
        _her_kernel, batch=B, beta=beta, exp_neg_beta=exp_neg_beta,
        w_low=w_low, w_high=w_high, fill_low=fill_low, pad=pad)

    out = pl.pallas_call(
        kernel,
        out_shape=jax.ShapeDtypeStruct((8 * g, 128), jnp.float32),
        grid=(g, g),
        in_specs=[
            pl.BlockSpec((t, D), lambda r, c: (r, 0)),   # grd rows (resident over c)
            pl.BlockSpec((t, D), lambda r, c: (c, 0)),   # sat column block (pipelined)
            pl.BlockSpec((t, D), lambda r, c: (r, 0)),   # sat rows aligned w/ grd (diag)
        ],
        out_specs=pl.BlockSpec((8, 128), lambda r, c: (r, 0)),   # accumulator over c
        scratch_shapes=[pltpu.VMEM((t, 1), jnp.float32)],        # u_i per row block
        compiler_params=pltpu.CompilerParams(
            dimension_semantics=("parallel", "arbitrary")),
    )(grd_p, sat_p, sat_p)

    totals = jnp.sum(out, axis=0)
    loss_mean = totals[0] / float(B * B)
    dp_mean = totals[1] / float(B)
    dn_mean = totals[2] / float(B * B)
    return loss_mean, dp_mean, dn_mean


def _her_ref(sat, grd, margin_cal):
    """Pure-JAX reference replicating the PyTorch forward (main path)."""
    sat = ALPHA * sat
    grd = ALPHA * grd
    margin = (ALPHA ** 2) * float(margin_cal)
    B = grd.shape[0]
    dg = jnp.sum(grd ** 2, axis=1)[:, None]
    ds = jnp.sum(sat ** 2, axis=1)[None, :]
    dn = dg + ds - 2.0 * grd @ sat.T
    dp = jnp.diagonal(dn)
    beta = margin / 2.0
    dist_rec = dp[:, None] - dn + beta
    p = 1.0 / (1.0 + jnp.exp(dist_rec))
    w = jnp.maximum(-jnp.log2(p + 1e-8), 0.0)
    w_low = -np.log2(1.0 / (1.0 + np.exp(-margin + beta) + 1e-8))
    w_high = -np.log2(1.0 / (1.0 + np.exp(beta) + 1e-8))
    w = jnp.where(w < w_low, 0.1 / B, w)
    w = jnp.where(w > w_high, w_high, w)
    w = w - jnp.diag(jnp.diagonal(w))
    losses = w * jnp.log(1.0 + jnp.exp(dp[:, None] - dn))
    return losses.mean(), dp.mean(), dn.mean()


if __name__ == "__main__":
    key = jax.random.PRNGKey(0)
    ks = jax.random.split(key, 6)
    margin_cal = 0.2

    def _norm(x):
        return x / jnp.linalg.norm(x, axis=1, keepdims=True)

    # --- small aligned case: grid (1,1) --------------------------------------
    sat = _norm(jax.random.normal(ks[0], (8, 128), dtype=jnp.float32))
    grd = _norm(jax.random.normal(ks[1], (8, 128), dtype=jnp.float32))
    out = her_triloss_or_unnorm(sat, grd, margin_cal)
    jax.block_until_ready(out)
    ref = _her_ref(sat, grd, margin_cal)
    for a, b in zip(out, ref):
        np.testing.assert_allclose(np.asarray(a), np.asarray(b), rtol=2e-3, atol=2e-3)

    # --- aligned multi-tile case: grid (2,2), accumulation + diag gating ------
    sat2 = _norm(jax.random.normal(ks[2], (32, 128), dtype=jnp.float32))
    grd2 = _norm(jax.random.normal(ks[3], (32, 128), dtype=jnp.float32))
    out2 = her_triloss_or_unnorm(sat2, grd2, margin_cal)
    jax.block_until_ready(out2)
    ref2 = _her_ref(sat2, grd2, margin_cal)
    for a, b in zip(out2, ref2):
        np.testing.assert_allclose(np.asarray(a), np.asarray(b), rtol=2e-3, atol=2e-3)

    # --- unaligned case: B=12 padded to 16, grid (2,2), padding masks ---------
    sat3 = _norm(jax.random.normal(ks[4], (12, 64), dtype=jnp.float32))
    grd3 = _norm(jax.random.normal(ks[5], (12, 64), dtype=jnp.float32))
    out3 = her_triloss_or_unnorm(sat3, grd3, margin_cal)
    jax.block_until_ready(out3)
    ref3 = _her_ref(sat3, grd3, margin_cal)
    for a, b in zip(out3, ref3):
        np.testing.assert_allclose(np.asarray(a), np.asarray(b), rtol=2e-3, atol=2e-3)

    print("KERNEL_OK")
</pallas_src>

<mosaic_0001>
module attributes {stable_mosaic.version = 11 : i64} {
  func.func @_her_kernel(%arg0: i32, %arg1: i32, %arg2: memref<8x128xf32, #tpu.memory_space<vmem>>, %arg3: memref<8x128xf32, #tpu.memory_space<vmem>>, %arg4: memref<8x128xf32, #tpu.memory_space<vmem>>, %arg5: memref<8x128xf32, #tpu.memory_space<vmem>>, %arg6: memref<8x1xf32, #tpu.memory_space<vmem>>) attributes {dimension_semantics = [#tpu.dimension_semantics<parallel>, #tpu.dimension_semantics<arbitrary>], iteration_bounds = array<i64: 1, 1>, scalar_prefetch = 0 : i64, scratch_operands = 1 : i64, tpu.core_type = #tpu.core_type<tc>, window_params = [{transform_indices = @transform_0, window_bounds = array<i64: 8, 128>}, {transform_indices = @transform_1, window_bounds = array<i64: 8, 128>}, {transform_indices = @transform_2, window_bounds = array<i64: 8, 128>}, {transform_indices = @transform_3, window_bounds = array<i64: 8, 128>}]} {
    %c0 = arith.constant 0 : index
    %c0_0 = arith.constant 0 : index
    %0 = vector.load %arg2[%c0, %c0_0] : memref<8x128xf32, #tpu.memory_space<vmem>>, vector<8x128xf32>
    %c0_1 = arith.constant 0 : index
    %c0_2 = arith.constant 0 : index
    %1 = vector.load %arg3[%c0_1, %c0_2] : memref<8x128xf32, #tpu.memory_space<vmem>>, vector<8x128xf32>
    %c0_i32 = arith.constant 0 : i32
    %2 = arith.cmpi eq, %arg1, %c0_i32 : i32
    %3 = arith.extui %2 : i1 to i32
    %c0_i32_3 = arith.constant 0 : i32
    %4 = arith.cmpi ne, %3, %c0_i32_3 : i32
    scf.if %4 {
      %c0_36 = arith.constant 0 : index
      %c0_37 = arith.constant 0 : index
      %82 = vector.load %arg4[%c0_36, %c0_37] : memref<8x128xf32, #tpu.memory_space<vmem>>, vector<8x128xf32>
      %83 = arith.subf %0, %82 : vector<8x128xf32>
      %84 = arith.mulf %83, %83 : vector<8x128xf32>
      %cst_38 = arith.constant dense<0.000000e+00> : vector<8xf32>
      %85 = vector.multi_reduction <add>, %84, %cst_38 [1] : vector<8x128xf32> to vector<8xf32>
      %86 = vector.shape_cast %85 : vector<8xf32> to vector<8x1xf32>
      %87 = arith.mulf %0, %0 : vector<8x128xf32>
      %cst_39 = arith.constant dense<0.000000e+00> : vector<8xf32>
      %88 = vector.multi_reduction <add>, %87, %cst_39 [1] : vector<8x128xf32> to vector<8xf32>
      %89 = vector.shape_cast %88 : vector<8xf32> to vector<8x1xf32>
      %90 = arith.subf %86, %89 : vector<8x1xf32>
      %cst_40 = arith.constant 2.500000e+01 : f32
      %91 = vector.broadcast %cst_40 : f32 to vector<8x1xf32>
      %92 = arith.mulf %91, %90 : vector<8x1xf32>
      %cst_41 = arith.constant 2.500000e+00 : f32
      %93 = vector.broadcast %cst_41 : f32 to vector<8x1xf32>
      %94 = arith.addf %92, %93 : vector<8x1xf32>
      %c0_42 = arith.constant 0 : index
      %c0_43 = arith.constant 0 : index
      %95 = vector.load %arg6[%c0_42, %c0_43] : memref<8x1xf32, #tpu.memory_space<vmem>>, vector<8x1xf32>
      tpu.vector_store %arg6[%c0_42, %c0_43], %94 {strides = array<i32>} : memref<8x1xf32, #tpu.memory_space<vmem>>, vector<8x1xf32>,
      %cst_44 = arith.constant dense<0.000000e+00> : vector<1xf32>
      %96 = vector.multi_reduction <add>, %86, %cst_44 [0] : vector<8x1xf32> to vector<1xf32>
      %97 = vector.shape_cast %96 : vector<1xf32> to vector<1x1xf32>
      %cst_45 = arith.constant 2.500000e+01 : f32
      %98 = vector.broadcast %cst_45 : f32 to vector<1x1xf32>
      %99 = arith.mulf %98, %97 : vector<1x1xf32>
      %cst_46 = arith.constant dense<0.000000e+00> : vector<1xf32>
      %100 = vector.multi_reduction <add>, %89, %cst_46 [0] : vector<8x1xf32> to vector<1xf32>
      %101 = vector.shape_cast %100 : vector<1xf32> to vector<1x1xf32>
      %cst_47 = arith.constant 2.000000e+02 : f32
      %102 = vector.broadcast %cst_47 : f32 to vector<1x1xf32>
      %103 = arith.mulf %102, %101 : vector<1x1xf32>
      %104 = tpu.iota {dimensions = array<i32: 1>} : vector<8x128xi32>
      %105 = tpu.iota {dimensions = array<i32: 0>} : vector<8x128xi32>
      %c0_i32_48 = arith.constant 0 : i32
      %106 = vector.broadcast %c0_i32_48 : i32 to vector<8x128xi32>
      %107 = arith.cmpi eq, %104, %106 : vector<8x128xi32>
      %c1_i32_49 = arith.constant 1 : i32
      %108 = vector.broadcast %c1_i32_49 : i32 to vector<8x128xi32>
      %109 = arith.cmpi eq, %104, %108 : vector<8x128xi32>
      %c2_i32_50 = arith.constant 2 : i32
      %110 = vector.broadcast %c2_i32_50 : i32 to vector<8x128xi32>
      %111 = arith.cmpi eq, %104, %110 : vector<8x128xi32>
      %cst_51 = arith.constant 0.000000e+00 : f32
      %112 = vector.shape_cast %103 : vector<1x1xf32> to vector<1x1xf32>
      %113 = vector.broadcast %112 : vector<1x1xf32> to vector<8x128xf32>
      %114 = vector.broadcast %cst_51 : f32 to vector<8x128xf32>
      %115 = arith.select %111, %113, %114 : vector<8x128xi1>, vector<8x128xf32>
      %116 = vector.shape_cast %99 : vector<1x1xf32> to vector<1x1xf32>
      %117 = vector.broadcast %116 : vector<1x1xf32> to vector<8x128xf32>
      %118 = arith.select %109, %117, %115 : vector<8x128xi1>, vector<8x128xf32>
      %cst_52 = arith.constant 0.000000e+00 : f32
      %119 = vector.broadcast %cst_52 : f32 to vector<8x128xf32>
      %120 = arith.select %107, %119, %118 : vector<8x128xi1>, vector<8x128xf32>
      %c0_i32_53 = arith.constant 0 : i32
      %121 = vector.broadcast %c0_i32_53 : i32 to vector<8x128xi32>
      %122 = arith.cmpi eq, %105, %121 : vector<8x128xi32>
      %cst_54 = arith.constant 0.000000e+00 : f32
      %123 = vector.broadcast %cst_54 : f32 to vector<8x128xf32>
      %124 = arith.select %122, %120, %123 : vector<8x128xi1>, vector<8x128xf32>
      %c0_55 = arith.constant 0 : index
      %c0_56 = arith.constant 0 : index
      %125 = vector.load %arg5[%c0_55, %c0_56] : memref<8x128xf32, #tpu.memory_space<vmem>>, vector<8x128xf32>
      tpu.vector_store %arg5[%c0_55, %c0_56], %124 {strides = array<i32>} : memref<8x128xf32, #tpu.memory_space<vmem>>, vector<8x128xf32>,
    } else {
    }
    %cst = arith.constant dense<0.000000e+00> : vector<8x8xf32>
    %5 = tpu.matmul %0, %1, %cst {dimension_numbers = #tpu.dot_dimension_numbers<[1], [1], [0], [0], [0, 0, 1, 0], [], []>} : vector<8x128xf32>, vector<8x128xf32>, vector<8x8xf32> -> vector<8x8xf32>
    %cst_4 = arith.constant 1.000000e+00 : f32
    %6 = vector.broadcast %cst_4 : f32 to vector<1x128xf32>
    %7 = arith.mulf %1, %1 : vector<8x128xf32>
    %cst_5 = arith.constant dense<0.000000e+00> : vector<1x8xf32>
    %8 = tpu.matmul %6, %7, %cst_5 {dimension_numbers = #tpu.dot_dimension_numbers<[1], [1], [0], [0], [0, 0, 1, 0], [], []>} : vector<1x128xf32>, vector<8x128xf32>, vector<1x8xf32> -> vector<1x8xf32>
    %cst_6 = arith.constant 2.500000e+01 : f32
    %9 = vector.broadcast %cst_6 : f32 to vector<1x8xf32>
    %10 = arith.mulf %9, %8 : vector<1x8xf32>
    %c0_7 = arith.constant 0 : index
    %c0_8 = arith.constant 0 : index
    %11 = vector.load %arg6[%c0_7, %c0_8] : memref<8x1xf32, #tpu.memory_space<vmem>>, vector<8x1xf32>
    %cst_9 = arith.constant 5.000000e+01 : f32
    %12 = vector.broadcast %cst_9 : f32 to vector<8x8xf32>
    %13 = arith.mulf %12, %5 : vector<8x8xf32>
    %14 = vector.broadcast %11 : vector<8x1xf32> to vector<8x8xf32>
    %15 = arith.addf %13, %14 : vector<8x8xf32>
    %16 = vector.broadcast %10 : vector<1x8xf32> to vector<8x8xf32>
    %17 = arith.subf %15, %16 : vector<8x8xf32>
    %18 = math.exp %17 : vector<8x8xf32>
    %cst_10 = arith.constant 1.000000e+00 : f32
    %19 = vector.broadcast %cst_10 : f32 to vector<8x8xf32>
    %20 = arith.addf %19, %18 : vector<8x8xf32>
    %21 = math.log %20 : vector<8x8xf32>
    %cst_11 = arith.constant 1.44269502 : f32
    %22 = vector.broadcast %cst_11 : f32 to vector<8x8xf32>
    %23 = arith.mulf %21, %22 : vector<8x8xf32>
    %cst_12 = arith.constant 0.11381384 : f32
    %24 = vector.broadcast %cst_12 : f32 to vector<8x8xf32>
    %25 = arith.cmpf olt, %23, %24 : vector<8x8xf32>
    %cst_13 = arith.constant 1.250000e-02 : f32
    %26 = vector.broadcast %cst_13 : f32 to vector<8x8xf32>
    %27 = arith.select %25, %26, %23 : vector<8x8xi1>, vector<8x8xf32>
    %cst_14 = arith.constant 3.72055149 : f32
    %28 = vector.broadcast %cst_14 : f32 to vector<8x8xf32>
    %29 = arith.cmpf ogt, %27, %28 : vector<8x8xf32>
    %cst_15 = arith.constant 3.72055149 : f32
    %30 = vector.broadcast %cst_15 : f32 to vector<8x8xf32>
    %31 = arith.select %29, %30, %27 : vector<8x8xi1>, vector<8x8xf32>
    %cst_16 = arith.constant 8.208500e-02 : f32
    %32 = vector.broadcast %cst_16 : f32 to vector<8x8xf32>
    %33 = arith.mulf %18, %32 : vector<8x8xf32>
    %cst_17 = arith.constant 1.000000e+00 : f32
    %34 = vector.broadcast %cst_17 : f32 to vector<8x8xf32>
    %35 = arith.addf %34, %33 : vector<8x8xf32>
    %36 = math.log %35 : vector<8x8xf32>
    %37 = arith.mulf %31, %36 : vector<8x8xf32>
    %cst_18 = arith.constant dense<0.000000e+00> : vector<8xf32>
    %38 = vector.multi_reduction <add>, %37, %cst_18 [1] : vector<8x8xf32> to vector<8xf32>
    %39 = vector.shape_cast %38 : vector<8xf32> to vector<8x1xf32>
    %cst_19 = arith.constant dense<0.000000e+00> : vector<1xf32>
    %40 = vector.multi_reduction <add>, %39, %cst_19 [0] : vector<8x1xf32> to vector<1xf32>
    %41 = vector.shape_cast %40 : vector<1xf32> to vector<1x1xf32>
    %cst_20 = arith.constant dense<0.000000e+00> : vector<1xf32>
    %42 = vector.multi_reduction <add>, %8, %cst_20 [1] : vector<1x8xf32> to vector<1xf32>
    %43 = vector.shape_cast %42 : vector<1xf32> to vector<1x1xf32>
    %cst_21 = arith.constant dense<0.000000e+00> : vector<8xf32>
    %44 = vector.multi_reduction <add>, %5, %cst_21 [1] : vector<8x8xf32> to vector<8xf32>
    %45 = vector.shape_cast %44 : vector<8xf32> to vector<8x1xf32>
    %cst_22 = arith.constant dense<0.000000e+00> : vector<1xf32>
    %46 = vector.multi_reduction <add>, %45, %cst_22 [0] : vector<8x1xf32> to vector<1xf32>
    %47 = vector.shape_cast %46 : vector<1xf32> to vector<1x1xf32>
    %cst_23 = arith.constant 8.000000e+00 : f32
    %48 = vector.broadcast %cst_23 : f32 to vector<1x1xf32>
    %49 = arith.mulf %48, %43 : vector<1x1xf32>
    %cst_24 = arith.constant 2.500000e+01 : f32
    %50 = vector.broadcast %cst_24 : f32 to vector<1x1xf32>
    %51 = arith.mulf %50, %49 : vector<1x1xf32>
    %cst_25 = arith.constant 5.000000e+01 : f32
    %52 = vector.broadcast %cst_25 : f32 to vector<1x1xf32>
    %53 = arith.mulf %52, %47 : vector<1x1xf32>
    %54 = arith.subf %51, %53 : vector<1x1xf32>
    %c0_26 = arith.constant 0 : index
    %c0_27 = arith.constant 0 : index
    %55 = vector.load %arg5[%c0_26, %c0_27] : memref<8x128xf32, #tpu.memory_space<vmem>>, vector<8x128xf32>
    %56 = tpu.iota {dimensions = array<i32: 1>} : vector<8x128xi32>
    %57 = tpu.iota {dimensions = array<i32: 0>} : vector<8x128xi32>
    %c0_i32_28 = arith.constant 0 : i32
    %58 = vector.broadcast %c0_i32_28 : i32 to vector<8x128xi32>
    %59 = arith.cmpi eq, %56, %58 : vector<8x128xi32>
    %c1_i32 = arith.constant 1 : i32
    %60 = vector.broadcast %c1_i32 : i32 to vector<8x128xi32>
    %61 = arith.cmpi eq, %56, %60 : vector<8x128xi32>
    %c2_i32 = arith.constant 2 : i32
    %62 = vector.broadcast %c2_i32 : i32 to vector<8x128xi32>
    %63 = arith.cmpi eq, %56, %62 : vector<8x128xi32>
    %cst_29 = arith.constant 0.000000e+00 : f32
    %64 = vector.shape_cast %54 : vector<1x1xf32> to vector<1x1xf32>
    %65 = vector.broadcast %64 : vector<1x1xf32> to vector<8x128xf32>
    %66 = vector.broadcast %cst_29 : f32 to vector<8x128xf32>
    %67 = arith.select %63, %65, %66 : vector<8x128xi1>, vector<8x128xf32>
    %cst_30 = arith.constant 0.000000e+00 : f32
    %68 = vector.broadcast %cst_30 : f32 to vector<8x128xf32>
    %69 = arith.select %61, %68, %67 : vector<8x128xi1>, vector<8x128xf32>
    %70 = vector.shape_cast %41 : vector<1x1xf32> to vector<1x1xf32>
    %71 = vector.broadcast %70 : vector<1x1xf32> to vector<8x128xf32>
    %72 = arith.select %59, %71, %69 : vector<8x128xi1>, vector<8x128xf32>
    %c0_i32_31 = arith.constant 0 : i32
    %73 = vector.broadcast %c0_i32_31 : i32 to vector<8x128xi32>
    %74 = arith.cmpi eq, %57, %73 : vector<8x128xi32>
    %cst_32 = arith.constant 0.000000e+00 : f32
    %75 = vector.broadcast %cst_32 : f32 to vector<8x128xf32>
    %76 = arith.select %74, %72, %75 : vector<8x128xi1>, vector<8x128xf32>
    %77 = arith.addf %55, %76 : vector<8x128xf32>
    %c0_33 = arith.constant 0 : index
    %c0_34 = arith.constant 0 : index
    %78 = vector.load %arg5[%c0_33, %c0_34] : memref<8x128xf32, #tpu.memory_space<vmem>>, vector<8x128xf32>
    tpu.vector_store %arg5[%c0_33, %c0_34], %77 {strides = array<i32>} : memref<8x128xf32, #tpu.memory_space<vmem>>, vector<8x128xf32>,
    %79 = arith.cmpi eq, %arg0, %arg1 : i32
    %80 = arith.extui %79 : i1 to i32
    %c0_i32_35 = arith.constant 0 : i32
    %81 = arith.cmpi ne, %80, %c0_i32_35 : i32
    scf.if %81 {
      %82 = tpu.iota {dimensions = array<i32: 0>} : vector<8x8xi32>
      %83 = tpu.iota {dimensions = array<i32: 1>} : vector<8x8xi32>
      %84 = arith.cmpi eq, %82, %83 : vector<8x8xi32>
      %cst_36 = arith.constant 0.000000e+00 : f32
      %85 = vector.broadcast %cst_36 : f32 to vector<8x8xf32>
      %86 = arith.select %84, %37, %85 : vector<8x8xi1>, vector<8x8xf32>
      %cst_37 = arith.constant dense<0.000000e+00> : vector<8xf32>
      %87 = vector.multi_reduction <add>, %86, %cst_37 [1] : vector<8x8xf32> to vector<8xf32>
      %88 = vector.shape_cast %87 : vector<8xf32> to vector<8x1xf32>
      %cst_38 = arith.constant dense<0.000000e+00> : vector<1xf32>
      %89 = vector.multi_reduction <add>, %88, %cst_38 [0] : vector<8x1xf32> to vector<1xf32>
      %90 = vector.shape_cast %89 : vector<1xf32> to vector<1x1xf32>
      %c0_39 = arith.constant 0 : index
      %c0_40 = arith.constant 0 : index
      %91 = vector.load %arg5[%c0_39, %c0_40] : memref<8x128xf32, #tpu.memory_space<vmem>>, vector<8x128xf32>
      %92 = tpu.iota {dimensions = array<i32: 1>} : vector<8x128xi32>
      %93 = tpu.iota {dimensions = array<i32: 0>} : vector<8x128xi32>
      %c0_i32_41 = arith.constant 0 : i32
      %94 = vector.broadcast %c0_i32_41 : i32 to vector<8x128xi32>
      %95 = arith.cmpi eq, %92, %94 : vector<8x128xi32>
      %c1_i32_42 = arith.constant 1 : i32
      %96 = vector.broadcast %c1_i32_42 : i32 to vector<8x128xi32>
      %97 = arith.cmpi eq, %92, %96 : vector<8x128xi32>
      %c2_i32_43 = arith.constant 2 : i32
      %98 = vector.broadcast %c2_i32_43 : i32 to vector<8x128xi32>
      %99 = arith.cmpi eq, %92, %98 : vector<8x128xi32>
      %cst_44 = arith.constant 0.000000e+00 : f32
      %cst_45 = arith.constant 0.000000e+00 : f32
      %100 = vector.broadcast %cst_44 : f32 to vector<8x128xf32>
      %101 = vector.broadcast %cst_45 : f32 to vector<8x128xf32>
      %102 = arith.select %99, %100, %101 : vector<8x128xi1>, vector<8x128xf32>
      %cst_46 = arith.constant 0.000000e+00 : f32
      %103 = vector.broadcast %cst_46 : f32 to vector<8x128xf32>
      %104 = arith.select %97, %103, %102 : vector<8x128xi1>, vector<8x128xf32>
      %105 = vector.shape_cast %90 : vector<1x1xf32> to vector<1x1xf32>
      %106 = vector.broadcast %105 : vector<1x1xf32> to vector<8x128xf32>
      %107 = arith.select %95, %106, %104 : vector<8x128xi1>, vector<8x128xf32>
      %c0_i32_47 = arith.constant 0 : i32
      %108 = vector.broadcast %c0_i32_47 : i32 to vector<8x128xi32>
      %109 = arith.cmpi eq, %93, %108 : vector<8x128xi32>
      %cst_48 = arith.constant 0.000000e+00 : f32
      %110 = vector.broadcast %cst_48 : f32 to vector<8x128xf32>
      %111 = arith.select %109, %107, %110 : vector<8x128xi1>, vector<8x128xf32>
      %112 = arith.subf %91, %111 : vector<8x128xf32>
      %c0_49 = arith.constant 0 : index
      %c0_50 = arith.constant 0 : index
      %113 = vector.load %arg5[%c0_49, %c0_50] : memref<8x128xf32, #tpu.memory_space<vmem>>, vector<8x128xf32>
      tpu.vector_store %arg5[%c0_49, %c0_50], %112 {strides = array<i32>} : memref<8x128xf32, #tpu.memory_space<vmem>>, vector<8x128xf32>,
    } else {
    }
    return
  }
  func.func @transform_0(%arg0: i32, %arg1: i32) -> (i32, i32) {
    %c0_i32 = arith.constant 0 : i32
    %c0_i32_0 = arith.constant 0 : i32
    return %arg0, %c0_i32 : i32, i32
  }
  func.func @transform_1(%arg0: i32, %arg1: i32) -> (i32, i32) {
    %c0_i32 = arith.constant 0 : i32
    %c0_i32_0 = arith.constant 0 : i32
    return %arg1, %c0_i32 : i32, i32
  }
  func.func @transform_2(%arg0: i32, %arg1: i32) -> (i32, i32) {
    %c0_i32 = arith.constant 0 : i32
    %c0_i32_0 = arith.constant 0 : i32
    return %arg0, %c0_i32 : i32, i32
  }
  func.func @transform_3(%arg0: i32, %arg1: i32) -> (i32, i32) {
    %c0_i32 = arith.constant 0 : i32
    %c0_i32_0 = arith.constant 0 : i32
    return %arg0, %c0_i32 : i32, i32
  }
}

</mosaic_0001>

<llo_original>
// kernel: tpu_custom_call.1
$region0: #{tpu_custom_call.1}
  #allocation0 [shape = 'u32[]', space=smem, size = 0x4, offset = 0x4, fixed_abs, tag = 'smem constant byte address 0x4 - core index']
  #allocation1 [shape = 'u32[144,128]{1,0:T(1,128)}', space=vmem, size = 0x12000, scoped, tag = 'internal scratch']
  #allocation2 [shape = 'f32[8,1]{1,0:T(8,128)}', space=vmem, size = 0x1000, scoped, tag = 'scratch operand']
  %s0 = inlined_call_operand.hbm [shape: f32[8,128], index: 0, kind: input, shape index: {}]
  %s1 = inlined_call_operand.hbm [shape: f32[8,128], index: 1, kind: input, shape index: {}]
  %s2 = inlined_call_operand.hbm [shape: f32[8,128], index: 2, kind: input, shape index: {}]
  %s3 = inlined_call_operand.hbm [shape: f32[8,128], index: 3, kind: output, shape index: {}]
  %s4 = sld [smem:[#allocation0]]
  $region42: #{tpu_custom_call.1} parent=0
    _
  %s6 = ssub.s32 1, %s4
  %s7 = scalar_select 0, %s6, %s4
  $region1: #{tpu_custom_call.1} parent=0
    #allocation3 [shape = 'u8[4096]{0}', space=vmem, size = 0x1000, scoped, tag = 'input window, operand 0, single buffered']
    #allocation4 [shape = 's32[1]{0}', space=sflag, size = 0x4, scoped, tag = 'scoped memory for tpu_custom_call.1']
    #allocation5 [shape = 's32[1]{0}', space=sflag, size = 0x4, scoped, tag = 'scoped memory for tpu_custom_call.1']
    #allocation6 [shape = 'u8[4096]{0}', space=vmem, size = 0x1000, scoped, tag = 'input window, operand 1, single buffered']
    #allocation7 [shape = 's32[1]{0}', space=sflag, size = 0x4, scoped, tag = 'scoped memory for tpu_custom_call.1']
    #allocation8 [shape = 'u8[4096]{0}', space=vmem, size = 0x1000, scoped, tag = 'input window, operand 2, single buffered']
    #allocation9 [shape = 'u8[4096]{0}', space=vmem, size = 0x1000, scoped, tag = 'output window, operand 0, single buffered']
    %8 = vsyncpa [#allocation4], 0
    %9 = vsyncpa [#allocation7], 0
    %10 = vsyncpa [#allocation5], 0
    // Predicated region
    $region2: #{tpu_custom_call.1} parent=1 // pred_check
      _
    $region3: #{tpu_custom_call.1} parent=1 // pred_check_branch
      %12 = sbr.rel (0) target = $region5
    $region4: #{tpu_custom_call.1} parent=1 // pred_region
      %s14 = ssub.s32 128, 128
      %15 = vsyncadd [#allocation4], %s14
      %s17 = sshll.u32 [#allocation3], 4
      %s18 = int_to_ptr.vmem [resolvable:$true] %s17
      %20 = dma.hbm_to_vmem [thread:$0]  %s0, 128, %s18, [#allocation4]
    $region5: #{tpu_custom_call.1} parent=1 // pred_fallthru
      _
    // Predicated region
    $region6: #{tpu_custom_call.1} parent=1 // pred_check
      _
    $region7: #{tpu_custom_call.1} parent=1 // pred_check_branch
      %22 = sbr.rel (0) target = $region9
    $region8: #{tpu_custom_call.1} parent=1 // pred_region
      %s24 = ssub.s32 128, 128
      %25 = vsyncadd [#allocation7], %s24
      %s27 = sshll.u32 [#allocation6], 4
      %s28 = int_to_ptr.vmem [resolvable:$true] %s27
      %30 = dma.hbm_to_vmem [thread:$0]  %s1, 128, %s28, [#allocation7]
    $region9: #{tpu_custom_call.1} parent=1 // pred_fallthru
      _
    // Predicated region
    $region10: #{tpu_custom_call.1} parent=1 // pred_check
      _
    $region11: #{tpu_custom_call.1} parent=1 // pred_check_branch
      %32 = sbr.rel (0) target = $region13
    $region12: #{tpu_custom_call.1} parent=1 // pred_region
      %s34 = ssub.s32 128, 128
      %35 = vsyncadd [#allocation7], %s34
      %s37 = sshll.u32 [#allocation8], 4
      %s38 = int_to_ptr.vmem [resolvable:$true] %s37
      %40 = dma.hbm_to_vmem [thread:$0]  %s2, 128, %s38, [#allocation7]
    $region13: #{tpu_custom_call.1} parent=1 // pred_fallthru
      _
    // Predicated region
    $region14: #{tpu_custom_call.1} parent=1 // pred_check
      _
    $region15: #{tpu_custom_call.1} parent=1 // pred_check_branch
      %42 = sbr.rel (0) target = $region17
    $region16: #{tpu_custom_call.1} parent=1 // pred_region
      %43 = dma.done [#allocation4], 128
    $region17: #{tpu_custom_call.1} parent=1 // pred_fallthru
      _
    // Predicated region
    $region18: #{tpu_custom_call.1} parent=1 // pred_check
      _
    $region19: #{tpu_custom_call.1} parent=1 // pred_check_branch
      %45 = sbr.rel (0) target = $region21
    $region20: #{tpu_custom_call.1} parent=1 // pred_region
      %46 = dma.done [#allocation7], 128
    $region21: #{tpu_custom_call.1} parent=1 // pred_fallthru
      _
    // Predicated region
    $region22: #{tpu_custom_call.1} parent=1 // pred_check
      _
    $region23: #{tpu_custom_call.1} parent=1 // pred_check_branch
      %48 = sbr.rel (0) target = $region25
    $region24: #{tpu_custom_call.1} parent=1 // pred_region
      %49 = dma.done [#allocation7], 128
    $region25: #{tpu_custom_call.1} parent=1 // pred_fallthru
      _
    %v50 = vld [vmem:[#allocation3] sm:$0xff]
    %v51 = vld [vmem:[#allocation6] sm:$0xff]
    %p52 = scmp.eq.s32.totalorder 0, 0
    // Predicated region
    $region26: #{tpu_custom_call.1} parent=1 // pred_check
      %p53 = pneg %p52
    $region27: #{tpu_custom_call.1} parent=1 // pred_check_branch
      %55 = sbr.rel (%p53) target = $region29
    $region28: #{tpu_custom_call.1} parent=1 // pred_region
      %v56 = vld [vmem:[#allocation8] sm:$0xff]
      %v57 = vsub.f32 %v50, %v56
      %v58 = vmul.f32 %v57, %v57
      %59 = vadd.xlane.f32.xlu0 %v58
      %v60 = vpop.xlane.xlu0 %59
      %v61 = vmul.f32 %v50, %v50
      %62 = vadd.xlane.f32.xlu0 %v61
      %v63 = vpop.xlane.xlu0 %62
      %v64 = vsub.f32 %v60, %v63
      %v65 = vmul.f32 %v64, 25.0
      %v66 = vadd.f32 %v65, 2.5
      %vm67 = vcmask 7168
      %68 = vst.msk [vmem:[#allocation2] sm:$0xff] %vm67, %v66
      %v69 = vrot.slane %v60, 4
      %v70 = vadd.f32 %v60, %v69
      %v71 = vrot.slane %v70, 2
      %v72 = vadd.f32 %v70, %v71
      %v73 = vrot.slane %v72, 1
      %v74 = vadd.f32 %v72, %v73
      %v75 = vmul.f32 %v74, 25.0
      %v76 = vrot.slane %v63, 4
      %v77 = vadd.f32 %v63, %v76
      %v78 = vrot.slane %v77, 2
      %v79 = vadd.f32 %v77, %v78
      %v80 = vrot.slane %v79, 1
      %v81 = vadd.f32 %v79, %v80
      %v82 = vmul.f32 %v81, 200.0
      %v83 = vlaneseq
      %v84 = vand.u32 %v83, 127
      %v85 = vlaneseq
      %v86 = vshrl.u32 %v85, 7
      %vm87 = vcmp.eq.s32.totalorder %v84, 0
      %vm88 = vcmp.eq.s32.totalorder %v84, 1
      %vm89 = vcmp.eq.s32.totalorder %v84, 2
      %v90 = vsel %vm89, %v82, 0.0
      %v91 = vsel %vm88, %v75, %v90
      %v92 = vsel %vm87, 0.0, %v91
      %vm93 = vcmp.eq.s32.totalorder %v86, 0
      %v94 = vsel %vm93, %v92, 0.0
      %95 = vst [vmem:[#allocation9] sm:$0xff] %v94
    $region29: #{tpu_custom_call.1} parent=1 // pred_fallthru
      _
    %96 = vmatprep.subr.mxu0 0.0
    %97 = vmatpush1.xpose.msra.mxu0 %v51
    %98 = vmatprep.subr.mxu0 0.0
    %99 = vmatpush1.xpose.msra.mxu0 0.0
    %100 = vmatprep.subr.mxu0 0.0
    %101 = vmatpush1.xpose.msra.mxu0 0.0
    %102 = vmatprep.subr.mxu0 0.0
    %103 = vmatpush1.xpose.msra.mxu0 0.0
    %104 = vmatprep.subr.mxu0 0.0
    %105 = vmatpush1.xpose.msra.mxu0 0.0
    %106 = vmatprep.subr.mxu0 0.0
    %107 = vmatpush1.xpose.msra.mxu0 0.0
    %108 = vmatprep.subr.mxu0 0.0
    %109 = vmatpush1.xpose.msra.mxu0 0.0
    %110 = vmatprep.subr.mxu0 0.0
    %111 = vmatpush1.xpose.msra.mxu0 0.0
    %112 = vmatprep.subr.mxu0 0.0
    %113 = vmatpush1.xpose.msra.mxu0 0.0
    %114 = vmatprep.subr.mxu0 0.0
    %115 = vmatpush1.xpose.msra.mxu0 0.0
    %116 = vmatprep.subr.mxu0 0.0
    %117 = vmatpush1.xpose.msra.mxu0 0.0
    %118 = vmatprep.subr.mxu0 0.0
    %119 = vmatpush1.xpose.msra.mxu0 0.0
    %120 = vmatprep.subr.mxu0 0.0
    %121 = vmatpush1.xpose.msra.mxu0 0.0
    %122 = vmatprep.subr.mxu0 0.0
    %123 = vmatpush1.xpose.msra.mxu0 0.0
    %124 = vmatprep.subr.mxu0 0.0
    %125 = vmatpush1.xpose.msra.mxu0 0.0
    %126 = vmatprep.subr.mxu0 0.0
    %127 = vmatpush1.xpose.msra.mxu0 0.0
    %128 = vmatprep.subr.mxu0 0.0
    %129 = vmatpush1.xpose.msra.mxu0 0.0
    %130 = vmatprep.subr.mxu0 0.0
    %131 = vmatpush1.xpose.msra.mxu0 0.0
    %132 = vmatprep.subr.mxu0 0.0
    %133 = vmatpush1.xpose.msra.mxu0 0.0
    %134 = vmatprep.subr.mxu0 0.0
    %135 = vmatpush1.xpose.msra.mxu0 0.0
    %136 = vmatprep.subr.mxu0 0.0
    %137 = vmatpush1.xpose.msra.mxu0 0.0
    %138 = vmatprep.subr.mxu0 0.0
    %139 = vmatpush1.xpose.msra.mxu0 0.0
    %140 = vmatprep.subr.mxu0 0.0
    %141 = vmatpush1.xpose.msra.mxu0 0.0
    %142 = vmatprep.subr.mxu0 0.0
    %143 = vmatpush1.xpose.msra.mxu0 0.0
    %144 = vmatprep.subr.mxu0 0.0
    %145 = vmatpush1.xpose.msra.mxu0 0.0
    %146 = vmatprep.subr.mxu0 0.0
    %147 = vmatpush1.xpose.msra.mxu0 0.0
    %148 = vmatprep.subr.mxu0 0.0
    %149 = vmatpush1.xpose.msra.mxu0 0.0
    %150 = vmatprep.subr.mxu0 0.0
    %151 = vmatpush1.xpose.msra.mxu0 0.0
    %152 = vmatprep.subr.mxu0 0.0
    %153 = vmatpush1.xpose.msra.mxu0 0.0
    %154 = vmatprep.subr.mxu0 0.0
    %155 = vmatpush1.xpose.msra.mxu0 0.0
    %156 = vmatprep.subr.mxu0 0.0
    %157 = vmatpush1.xpose.msra.mxu0 0.0
    %158 = vmatprep.subr.mxu0 0.0
    %159 = vmatpush1.xpose.msra.mxu0 0.0
    %160 = vmatprep.mubr.f32.mxu0 0.0
    %161 = vmatmul.mubr.f32.gmra.mrb[0].mxu0 %v50
    %v162 = vpop.f32.mrb[0].mxu0
    %v163 = vadd.f32 0.0, %v162
    %v164 = vpop.f32.mrb[0].mxu0
    %165 = vdwg.mxu0
    %v166 = vmul.f32 %v51, %v51
    %167 = vmatprep.subr.mxu0 0.0
    %168 = vmatpush1.xpose.msra.mxu0 %v166
    %169 = vmatprep.subr.mxu0 0.0
    %170 = vmatpush1.xpose.msra.mxu0 0.0
    %171 = vmatprep.subr.mxu0 0.0
    %172 = vmatpush1.xpose.msra.mxu0 0.0
    %173 = vmatprep.subr.mxu0 0.0
    %174 = vmatpush1.xpose.msra.mxu0 0.0
    %175 = vmatprep.subr.mxu0 0.0
    %176 = vmatpush1.xpose.msra.mxu0 0.0
    %177 = vmatprep.subr.mxu0 0.0
    %178 = vmatpush1.xpose.msra.mxu0 0.0
    %179 = vmatprep.subr.mxu0 0.0
    %180 = vmatpush1.xpose.msra.mxu0 0.0
    %181 = vmatprep.subr.mxu0 0.0
    %182 = vmatpush1.xpose.msra.mxu0 0.0
    %183 = vmatprep.subr.mxu0 0.0
    %184 = vmatpush1.xpose.msra.mxu0 0.0
    %185 = vmatprep.subr.mxu0 0.0
    %186 = vmatpush1.xpose.msra.mxu0 0.0
    %187 = vmatprep.subr.mxu0 0.0
    %188 = vmatpush1.xpose.msra.mxu0 0.0
    %189 = vmatprep.subr.mxu0 0.0
    %190 = vmatpush1.xpose.msra.mxu0 0.0
    %191 = vmatprep.subr.mxu0 0.0
    %192 = vmatpush1.xpose.msra.mxu0 0.0
    %193 = vmatprep.subr.mxu0 0.0
    %194 = vmatpush1.xpose.msra.mxu0 0.0
    %195 = vmatprep.subr.mxu0 0.0
    %196 = vmatpush1.xpose.msra.mxu0 0.0
    %197 = vmatprep.subr.mxu0 0.0
    %198 = vmatpush1.xpose.msra.mxu0 0.0
    %199 = vmatprep.subr.mxu0 0.0
    %200 = vmatpush1.xpose.msra.mxu0 0.0
    %201 = vmatprep.subr.mxu0 0.0
    %202 = vmatpush1.xpose.msra.mxu0 0.0
    %203 = vmatprep.subr.mxu0 0.0
    %204 = vmatpush1.xpose.msra.mxu0 0.0
    %205 = vmatprep.subr.mxu0 0.0
    %206 = vmatpush1.xpose.msra.mxu0 0.0
    %207 = vmatprep.subr.mxu0 0.0
    %208 = vmatpush1.xpose.msra.mxu0 0.0
    %209 = vmatprep.subr.mxu0 0.0
    %210 = vmatpush1.xpose.msra.mxu0 0.0
    %211 = vmatprep.subr.mxu0 0.0
    %212 = vmatpush1.xpose.msra.mxu0 0.0
    %213 = vmatprep.subr.mxu0 0.0
    %214 = vmatpush1.xpose.msra.mxu0 0.0
    %215 = vmatprep.subr.mxu0 0.0
    %216 = vmatpush1.xpose.msra.mxu0 0.0
    %217 = vmatprep.subr.mxu0 0.0
    %218 = vmatpush1.xpose.msra.mxu0 0.0
    %219 = vmatprep.subr.mxu0 0.0
    %220 = vmatpush1.xpose.msra.mxu0 0.0
    %221 = vmatprep.subr.mxu0 0.0
    %222 = vmatpush1.xpose.msra.mxu0 0.0
    %223 = vmatprep.subr.mxu0 0.0
    %224 = vmatpush1.xpose.msra.mxu0 0.0
    %225 = vmatprep.subr.mxu0 0.0
    %226 = vmatpush1.xpose.msra.mxu0 0.0
    %227 = vmatprep.subr.mxu0 0.0
    %228 = vmatpush1.xpose.msra.mxu0 0.0
    %229 = vmatprep.subr.mxu0 0.0
    %230 = vmatpush1.xpose.msra.mxu0 0.0
    %231 = vmatprep.mubr.f32.mxu0 0.0
    %232 = vmatmul.mubr.f32.gmra.mrb[0].mxu0 1.0
    %v233 = vpop.f32.mrb[0].mxu0
    %v234 = vadd.f32 0.0, %v233
    %v235 = vpop.f32.mrb[0].mxu0
    %236 = vdwg.mxu0
    %v237 = vmul.f32 %v234, 25.0
    %v238 = vld [vmem:[#allocation2] sm:$0xff]
    %v239 = vmul.f32 %v163, 50.0
    %241 = vset.pattern.permute.xlu0 0
    %242 = vperm.xlu0 %241, %v238
    %v243 = vpop.permute.xlu0 %242
    %v245 = vadd.f32 %v239, %v243
    %v246 = vlaneseq
    %v247 = vshrl.u32 %v246, 7
    %v248 = vsub.s32 0, %v247
    %v249 = vrot.slane %v237, %v248
    %v250 = vsub.f32 %v245, %v249
    %v251 = vmul.f32 %v250, 1.442695
    %v252 = vpow.pop %v251
    %v253 = vadd.f32 %v252, 1.0
    %v254 = vlog2.pop %v253
    %v255 = vmul.f32 %v254, 0.6931472
    %v256 = vmul.f32 %v255, 1.442695
    %vm257 = vcmp.lt.f32.partialorder %v256, 0.11381384
    %v258 = vsel %vm257, 0.0125, %v256
    %vm259 = vcmp.gt.f32.partialorder %v258, 3.7205515
    %v260 = vsel %vm259, 3.7205515, %v258
    %v261 = vmul.f32 %v252, 0.082085
    %v262 = vadd.f32 %v261, 1.0
    %v263 = vlog2.pop %v262
    %v264 = vmul.f32 %v263, 0.6931472
    %v265 = vmul.f32 %v260, %v264
    %vm266 = vcmask 64512
    %v267 = vsel %vm266, %v265, 0.0
    %268 = vadd.xlane.f32.xlu0 %v267
    %v269 = vpop.xlane.xlu0 %268
    %v270 = vrot.slane %v269, 4
    %v271 = vadd.f32 %v269, %v270
    %v272 = vrot.slane %v271, 2
    %v273 = vadd.f32 %v271, %v272
    %v274 = vrot.slane %v273, 1
    %v275 = vadd.f32 %v273, %v274
    %vm276 = vcmask 57344
    %v277 = vsel %vm276, %v234, 0.0
    %278 = vadd.xlane.f32.xlu0 %v277
    %v279 = vpop.xlane.xlu0 %278
    %v280 = vsel %vm266, %v163, 0.0
    %281 = vadd.xlane.f32.xlu0 %v280
    %v282 = vpop.xlane.xlu0 %281
    %v283 = vrot.slane %v282, 4
    %v284 = vadd.f32 %v282, %v283
    %v285 = vrot.slane %v284, 2
    %v286 = vadd.f32 %v284, %v285
    %v287 = vrot.slane %v286, 1
    %v288 = vadd.f32 %v286, %v287
    %v289 = vmul.f32 %v279, 8.0
    %v290 = vmul.f32 %v289, 25.0
    %v291 = vmul.f32 %v288, 50.0
    %v292 = vsub.f32 %v290, %v291
    %v293 = vld [vmem:[#allocation9] sm:$0xff]
    %v294 = vlaneseq
    %v295 = vand.u32 %v294, 127
    %v296 = vlaneseq
    %v297 = vshrl.u32 %v296, 7
    %vm298 = vcmp.eq.s32.totalorder %v295, 0
    %vm299 = vcmp.eq.s32.totalorder %v295, 1
    %vm300 = vcmp.eq.s32.totalorder %v295, 2
    %v301 = vlaneseq
    %v302 = vshrl.u32 %v301, 7
    %v303 = vsub.s32 0, %v302
    %v304 = vrot.slane %v292, %v303
    %v305 = vsel %vm300, %v304, 0.0
    %v306 = vsel %vm299, 0.0, %v305
    %v307 = vsel %vm298, %v275, %v306
    %vm308 = vcmp.eq.s32.totalorder %v297, 0
    %v309 = vsel %vm308, %v307, 0.0
    %v310 = vadd.f32 %v293, %v309
    %311 = vst [vmem:[#allocation9] sm:$0xff] %v310
    %p312 = scmp.eq.s32.totalorder 0, 0
    // Predicated region
    $region30: #{tpu_custom_call.1} parent=1 // pred_check
      %p313 = pneg %p312
    $region31: #{tpu_custom_call.1} parent=1 // pred_check_branch
      %315 = sbr.rel (%p313) target = $region33
    $region32: #{tpu_custom_call.1} parent=1 // pred_region
      %vm316 = vcmp.eq.s32.totalorder %v297, %v295
      %v317 = vsel %vm316, %v265, 0.0
      %v318 = vsel %vm266, %v317, 0.0
      %319 = vadd.xlane.f32.xlu0 %v318
      %v320 = vpop.xlane.xlu0 %319
      %v321 = vrot.slane %v320, 4
      %v322 = vadd.f32 %v320, %v321
      %v323 = vrot.slane %v322, 2
      %v324 = vadd.f32 %v322, %v323
      %v325 = vrot.slane %v324, 1
      %v326 = vadd.f32 %v324, %v325
      %v327 = vld [vmem:[#allocation9] sm:$0xff]
      %v328 = vsel %vm298, %v326, 0.0
      %v329 = vsel %vm308, %v328, 0.0
      %v330 = vsub.f32 %v327, %v329
      %331 = vst [vmem:[#allocation9] sm:$0xff] %v330
    $region33: #{tpu_custom_call.1} parent=1 // pred_fallthru
      _
    // Predicated region
    $region34: #{tpu_custom_call.1} parent=1 // pred_check
      _
    $region35: #{tpu_custom_call.1} parent=1 // pred_check_branch
      %333 = sbr.rel (0) target = $region37
    $region36: #{tpu_custom_call.1} parent=1 // pred_region
      %s335 = ssub.s32 128, 128
      %336 = vsyncadd [#allocation5], %s335
      %s338 = sshll.u32 [#allocation9], 4
      %s339 = int_to_ptr.vmem [resolvable:$true] %s338
      %341 = dma.vmem_to_hbm [thread:$0]  %s339, 128, %s3, [#allocation5]
    $region37: #{tpu_custom_call.1} parent=1 // pred_fallthru
      _
    // Predicated region
    $region38: #{tpu_custom_call.1} parent=1 // pred_check
      _
    $region39: #{tpu_custom_call.1} parent=1 // pred_check_branch
      %343 = sbr.rel (0) target = $region41
    $region40: #{tpu_custom_call.1} parent=1 // pred_region
      %344 = dma.done [#allocation5], 128
    $region41: #{tpu_custom_call.1} parent=1 // pred_fallthru
      _
    %345 = vsyncpa [#allocation4], 1
    %346 = vsyncpa [#allocation7], 1
    %347 = vsyncpa [#allocation5], 1

</llo_original>
